<compile_context>
chip_gen: v5e
topology: v5e:2x2
jax: 0.10.0
libtpu: 0.0.40
codegen_flags: <defaults>
</compile_context>

<pallas_src>
import functools
import math

import jax
import jax.numpy as jnp
from jax.experimental import pallas as pl
from jax.experimental.pallas import tpu as pltpu


_INV_SQRT2 = 1.0 / math.sqrt(2.0)


def _round_up(x, m):
    return ((x + m - 1) // m) * m


def _gelu_f32(h):
    # Exact erf-based GELU (matches torch.nn.GELU default), in f32.
    return 0.5 * h * (1.0 + jax.lax.erf(h * _INV_SQRT2))


def _ffn_chunk(x, w1c, b1c, w2c):
    """fc1(+bias) -> GELU -> fc2 partial product for one hidden chunk (f32 accum)."""
    h = jnp.dot(x, w1c, preferred_element_type=jnp.float32)
    h = h + b1c.astype(jnp.float32)
    h = _gelu_f32(h)
    return jnp.dot(h.astype(w2c.dtype), w2c, preferred_element_type=jnp.float32)


# --- Kernel A: weights pinned in VMEM (DMA'd once), grid = (token tiles,) ----
def _mlp_kernel_pinned(x_ref, w1_ref, b1_ref, w2_ref, b2_ref, o_ref):
    y = _ffn_chunk(x_ref[...], w1_ref[...], b1_ref[...], w2_ref[...])
    y = y + b2_ref[...].astype(jnp.float32)
    o_ref[...] = y.astype(o_ref.dtype)


# --- Kernel B: weights streamed per hidden chunk, grid = (token, hidden) -----
def _mlp_kernel_streamed(x_ref, w1_ref, b1_ref, w2_ref, b2_ref, o_ref, acc_ref):
    k = pl.program_id(1)

    @pl.when(k == 0)
    def _init():
        acc_ref[...] = jnp.zeros_like(acc_ref)

    acc_ref[...] += _ffn_chunk(x_ref[...], w1_ref[...], b1_ref[...], w2_ref[...])

    @pl.when(k == pl.num_programs(1) - 1)
    def _finalize():
        y = acc_ref[...] + b2_ref[...].astype(jnp.float32)
        o_ref[...] = y.astype(o_ref.dtype)


def prepare_mlp_params(w1, b1, w2, b2, *, param_dtype=None):
    """One-time parameter prep (hoisted off the hot path).

    w1: (hidden, in), b1: (hidden,), w2: (out, hidden), b2: (out,)  -- nn.Linear
    layout.  Transposes to (in, out) layout and zero-pads every feature dim to
    a multiple of 128 (padded hidden columns produce GELU(0)=0, so they add
    nothing).  Pass `param_dtype=jnp.bfloat16` to store MXU-native bf16 weights
    (halves weight DMA/VMEM); accumulation in the kernel stays f32.
    """
    hidden, d_in = w1.shape
    d_out = w2.shape[0]
    dtype = param_dtype or w1.dtype

    dp_in = _round_up(d_in, 128)
    hp = _round_up(hidden, 128)
    np_out = _round_up(d_out, 128)

    w1_t = jnp.zeros((dp_in, hp), dtype).at[:d_in, :hidden].set(w1.T.astype(dtype))
    b1_p = jnp.zeros((1, hp), dtype).at[0, :hidden].set(b1.astype(dtype))
    w2_t = jnp.zeros((hp, np_out), dtype).at[:hidden, :d_out].set(w2.T.astype(dtype))
    b2_p = jnp.zeros((1, np_out), dtype).at[0, :d_out].set(b2.astype(dtype))

    return dict(w1_t=w1_t, b1=b1_p, w2_t=w2_t, b2=b2_p,
                d_in=d_in, hidden=hidden, d_out=d_out)


def _default_vmem_limit_bytes():
    # 96 MiB on 128-MiB-VMEM parts (v5e/v6e), 48 MiB on 64-MiB parts (v7x).
    try:
        cap = int(getattr(pltpu.get_tpu_info(), "vmem_capacity_bytes", 0))
    except Exception:
        cap = 0
    return 96 * 1024 * 1024 if cap >= 100 * 1024 * 1024 else 48 * 1024 * 1024


@functools.partial(
    jax.jit,
    static_argnames=("d_in", "hidden", "d_out", "tm", "vmem_limit_bytes"))
def _mlp_pallas_impl(x, w1_t, b1, w2_t, b2, *, d_in, hidden, d_out, tm,
                     vmem_limit_bytes):
    dp_in, hp = w1_t.shape
    np_out = w2_t.shape[1]
    out_dtype = x.dtype

    orig_shape = x.shape
    x2d = x.reshape(-1, d_in)
    m = x2d.shape[0]

    # Row tile: 16-row multiple for bf16 (two rows per sublane), 8 otherwise.
    sub = 16 if x2d.dtype == jnp.bfloat16 else 8
    tm_eff = min(tm, _round_up(m, sub))
    # Expose >=2 token tiles so "parallel" can shard across TensorCores (v7x).
    if m > sub and (_round_up(m, tm_eff) // tm_eff) < 2:
        tm_eff = _round_up(max(sub, -(-m // 2)), sub)

    x_bytes = x2d.dtype.itemsize
    p_bytes = w1_t.dtype.itemsize
    o_bytes = jnp.dtype(out_dtype).itemsize
    weight_bytes = (w1_t.size + w2_t.size + b1.size + b2.size) * p_bytes

    def fits(nbytes):
        return nbytes <= int(0.7 * vmem_limit_bytes)

    # Pinned plan: full weights VMEM-resident (constant index_map -> one DMA
    # per call), full-hidden matmul per token tile, no accumulator scratch.
    pinned_bytes = (2 * weight_bytes                         # conservative 2x buffers
                    + 2 * tm_eff * dp_in * x_bytes           # x block (double-buffered)
                    + 2 * tm_eff * np_out * o_bytes          # out block (double-buffered)
                    + tm_eff * hp * 4 + tm_eff * np_out * 4)  # f32 intermediates
    pin_weights = fits(pinned_bytes)

    if not pin_weights:
        # Streamed plan: tile the hidden dim; shrink the row tile if needed.
        th = 512 if hp % 512 == 0 else (256 if hp % 256 == 0 else 128)

        def streamed_bytes(t):
            return (2 * (dp_in * th + th * np_out + th + np_out) * p_bytes
                    + 2 * t * dp_in * x_bytes + 2 * t * np_out * o_bytes
                    + t * np_out * 4 + t * th * 4)

        while tm_eff > sub and not fits(streamed_bytes(tm_eff)):
            tm_eff = max(sub, _round_up(tm_eff // 2, sub))

    mp = _round_up(m, tm_eff)

    # Skip the hot-path pad when shapes are already tile-aligned.
    if (mp != m) or (dp_in != d_in):
        x_p = jnp.zeros((mp, dp_in), x2d.dtype).at[:m, :d_in].set(x2d)
    else:
        x_p = x2d

    if pin_weights:
        out = pl.pallas_call(
            _mlp_kernel_pinned,
            out_shape=jax.ShapeDtypeStruct((mp, np_out), out_dtype),
            grid_spec=pltpu.PrefetchScalarGridSpec(
                num_scalar_prefetch=0,
                grid=(mp // tm_eff,),
                in_specs=[
                    pl.BlockSpec((tm_eff, dp_in), lambda i: (i, 0)),
                    pl.BlockSpec((dp_in, hp), lambda i: (0, 0)),    # resident
                    pl.BlockSpec((1, hp), lambda i: (0, 0)),        # resident
                    pl.BlockSpec((hp, np_out), lambda i: (0, 0)),   # resident
                    pl.BlockSpec((1, np_out), lambda i: (0, 0)),    # resident
                ],
                out_specs=pl.BlockSpec((tm_eff, np_out), lambda i: (i, 0)),
            ),
            compiler_params=pltpu.CompilerParams(
                dimension_semantics=("parallel",),
                vmem_limit_bytes=vmem_limit_bytes,
            ),
        )(x_p, w1_t, b1, w2_t, b2)
    else:
        out = pl.pallas_call(
            _mlp_kernel_streamed,
            out_shape=jax.ShapeDtypeStruct((mp, np_out), out_dtype),
            grid_spec=pltpu.PrefetchScalarGridSpec(
                num_scalar_prefetch=0,
                grid=(mp // tm_eff, hp // th),
                in_specs=[
                    pl.BlockSpec((tm_eff, dp_in), lambda i, k: (i, 0)),
                    pl.BlockSpec((dp_in, th), lambda i, k: (0, k)),
                    pl.BlockSpec((1, th), lambda i, k: (0, k)),
                    pl.BlockSpec((th, np_out), lambda i, k: (k, 0)),
                    pl.BlockSpec((1, np_out), lambda i, k: (0, 0)),
                ],
                out_specs=pl.BlockSpec((tm_eff, np_out), lambda i, k: (i, 0)),
                scratch_shapes=[pltpu.VMEM((tm_eff, np_out), jnp.float32)],
            ),
            compiler_params=pltpu.CompilerParams(
                dimension_semantics=("parallel", "arbitrary"),
                vmem_limit_bytes=vmem_limit_bytes,
            ),
        )(x_p, w1_t, b1, w2_t, b2)

    if (mp != m) or (np_out != d_out):
        out = out[:m, :d_out]
    return out.reshape(orig_shape[:-1] + (d_out,))


def mlp_pallas(x, params, *, tm=512, vmem_limit_bytes=None):
    """x: (..., in_features), params from prepare_mlp_params. -> (..., out_features)."""
    if vmem_limit_bytes is None:
        vmem_limit_bytes = _default_vmem_limit_bytes()
    return _mlp_pallas_impl(
        x, params["w1_t"], params["b1"], params["w2_t"], params["b2"],
        d_in=params["d_in"], hidden=params["hidden"], d_out=params["d_out"],
        tm=tm, vmem_limit_bytes=vmem_limit_bytes)


def _init_linear_params(key, out_features, in_features, dtype=jnp.float32):
    # Deterministic init matching nn.Linear's kaiming-uniform-ish bounds.
    kw, kb = jax.random.split(key)
    bound = 1.0 / math.sqrt(in_features)
    w = jax.random.uniform(kw, (out_features, in_features), dtype,
                           minval=-bound, maxval=bound)
    b = jax.random.uniform(kb, (out_features,), dtype,
                           minval=-bound, maxval=bound)
    return w, b


if __name__ == "__main__":
    key = jax.random.PRNGKey(0)
    k_x, k_fc1, k_fc2 = jax.random.split(key, 3)

    # Small shapes consistent with a transformer MLP block: x (batch, seq, C).
    batch, seq, in_features = 2, 8, 32
    hidden_features = 64
    out_features = in_features

    x = jax.random.normal(k_x, (batch, seq, in_features), jnp.float32)
    w1, b1 = _init_linear_params(k_fc1, hidden_features, in_features)
    w2, b2 = _init_linear_params(k_fc2, out_features, hidden_features)

    # One-time parameter preparation (transpose + pad hoisted off the hot path).
    # (For production, pass param_dtype=jnp.bfloat16 for MXU-native weights.)
    params = prepare_mlp_params(w1, b1, w2, b2)

    out = jax.block_until_ready(mlp_pallas(x, params))

    # Reference in plain JAX (same math: Linear -> exact-erf GELU -> Linear; drop p=0).
    h_ref = x @ w1.T + b1
    h_ref = 0.5 * h_ref * (1.0 + jax.lax.erf(h_ref / math.sqrt(2.0)))
    ref = h_ref @ w2.T + b2

    assert out.shape == (batch, seq, out_features)
    # Tolerance covers TPU default-precision matmul (bf16-pass) vs f32 reference.
    assert jnp.allclose(out, ref, atol=5e-3, rtol=5e-3), \
        float(jnp.max(jnp.abs(out - ref)))

    print("KERNEL_OK")
</pallas_src>

<mosaic_0001>
module attributes {stable_mosaic.version = 11 : i64} {
  func.func @_mlp_kernel_pinned(%arg0: i32, %arg1: memref<8x128xf32, #tpu.memory_space<vmem>>, %arg2: memref<128x128xf32, #tpu.memory_space<vmem>>, %arg3: memref<1x128xf32, #tpu.memory_space<vmem>>, %arg4: memref<128x128xf32, #tpu.memory_space<vmem>>, %arg5: memref<1x128xf32, #tpu.memory_space<vmem>>, %arg6: memref<8x128xf32, #tpu.memory_space<vmem>>) attributes {dimension_semantics = [#tpu.dimension_semantics<parallel>], iteration_bounds = array<i64: 2>, scalar_prefetch = 0 : i64, scratch_operands = 0 : i64, tpu.core_type = #tpu.core_type<tc>, window_params = [{transform_indices = @transform_0, window_bounds = array<i64: 8, 128>}, {pipeline_mode = #tpu.pipeline_mode<synchronous>, transform_indices = @transform_1, window_bounds = array<i64: 128, 128>}, {pipeline_mode = #tpu.pipeline_mode<synchronous>, transform_indices = @transform_2, window_bounds = array<i64: 1, 128>}, {pipeline_mode = #tpu.pipeline_mode<synchronous>, transform_indices = @transform_3, window_bounds = array<i64: 128, 128>}, {pipeline_mode = #tpu.pipeline_mode<synchronous>, transform_indices = @transform_4, window_bounds = array<i64: 1, 128>}, {transform_indices = @transform_5, window_bounds = array<i64: 8, 128>}]} {
    %c0 = arith.constant 0 : index
    %c0_0 = arith.constant 0 : index
    %0 = vector.load %arg1[%c0, %c0_0] : memref<8x128xf32, #tpu.memory_space<vmem>>, vector<8x128xf32>
    %c0_1 = arith.constant 0 : index
    %c0_2 = arith.constant 0 : index
    %1 = vector.load %arg2[%c0_1, %c0_2] : memref<128x128xf32, #tpu.memory_space<vmem>>, vector<128x128xf32>
    %c0_3 = arith.constant 0 : index
    %c0_4 = arith.constant 0 : index
    %2 = vector.load %arg3[%c0_3, %c0_4] : memref<1x128xf32, #tpu.memory_space<vmem>>, vector<1x128xf32>
    %c0_5 = arith.constant 0 : index
    %c0_6 = arith.constant 0 : index
    %3 = vector.load %arg4[%c0_5, %c0_6] : memref<128x128xf32, #tpu.memory_space<vmem>>, vector<128x128xf32>
    %cst = arith.constant dense<0.000000e+00> : vector<8x128xf32>
    %4 = tpu.matmul %0, %1, %cst {dimension_numbers = #tpu.dot_dimension_numbers<[1], [0], [0], [1], [0, 0, 1, 1], [], []>} : vector<8x128xf32>, vector<128x128xf32>, vector<8x128xf32> -> vector<8x128xf32>
    %5 = vector.broadcast %2 : vector<1x128xf32> to vector<8x128xf32>
    %6 = arith.addf %4, %5 : vector<8x128xf32>
    %cst_7 = arith.constant 5.000000e-01 : f32
    %7 = vector.broadcast %cst_7 : f32 to vector<8x128xf32>
    %8 = arith.mulf %7, %6 : vector<8x128xf32>
    %cst_8 = arith.constant 0.707106769 : f32
    %9 = vector.broadcast %cst_8 : f32 to vector<8x128xf32>
    %10 = arith.mulf %6, %9 : vector<8x128xf32>
    %11 = math.erf %10 : vector<8x128xf32>
    %cst_9 = arith.constant 1.000000e+00 : f32
    %12 = vector.broadcast %cst_9 : f32 to vector<8x128xf32>
    %13 = arith.addf %12, %11 : vector<8x128xf32>
    %14 = arith.mulf %8, %13 : vector<8x128xf32>
    %cst_10 = arith.constant dense<0.000000e+00> : vector<8x128xf32>
    %15 = tpu.matmul %14, %3, %cst_10 {dimension_numbers = #tpu.dot_dimension_numbers<[1], [0], [0], [1], [0, 0, 1, 1], [], []>} : vector<8x128xf32>, vector<128x128xf32>, vector<8x128xf32> -> vector<8x128xf32>
    %c0_11 = arith.constant 0 : index
    %c0_12 = arith.constant 0 : index
    %16 = vector.load %arg5[%c0_11, %c0_12] : memref<1x128xf32, #tpu.memory_space<vmem>>, vector<1x128xf32>
    %17 = vector.broadcast %16 : vector<1x128xf32> to vector<8x128xf32>
    %18 = arith.addf %15, %17 : vector<8x128xf32>
    %c0_13 = arith.constant 0 : index
    %c0_14 = arith.constant 0 : index
    %19 = vector.load %arg6[%c0_13, %c0_14] : memref<8x128xf32, #tpu.memory_space<vmem>>, vector<8x128xf32>
    tpu.vector_store %arg6[%c0_13, %c0_14], %18 {strides = array<i32>} : memref<8x128xf32, #tpu.memory_space<vmem>>, vector<8x128xf32>,
    return
  }
  func.func @transform_0(%arg0: i32) -> (i32, i32) {
    %c0_i32 = arith.constant 0 : i32
    %c0_i32_0 = arith.constant 0 : i32
    return %arg0, %c0_i32 : i32, i32
  }
  func.func @transform_1(%arg0: i32) -> (i32, i32) {
    %c0_i32 = arith.constant 0 : i32
    %c0_i32_0 = arith.constant 0 : i32
    %c0_i32_1 = arith.constant 0 : i32
    return %c0_i32, %c0_i32_0 : i32, i32
  }
  func.func @transform_2(%arg0: i32) -> (i32, i32) {
    %c0_i32 = arith.constant 0 : i32
    %c0_i32_0 = arith.constant 0 : i32
    %c0_i32_1 = arith.constant 0 : i32
    return %c0_i32, %c0_i32_0 : i32, i32
  }
  func.func @transform_3(%arg0: i32) -> (i32, i32) {
    %c0_i32 = arith.constant 0 : i32
    %c0_i32_0 = arith.constant 0 : i32
    %c0_i32_1 = arith.constant 0 : i32
    return %c0_i32, %c0_i32_0 : i32, i32
  }
  func.func @transform_4(%arg0: i32) -> (i32, i32) {
    %c0_i32 = arith.constant 0 : i32
    %c0_i32_0 = arith.constant 0 : i32
    %c0_i32_1 = arith.constant 0 : i32
    return %c0_i32, %c0_i32_0 : i32, i32
  }
  func.func @transform_5(%arg0: i32) -> (i32, i32) {
    %c0_i32 = arith.constant 0 : i32
    %c0_i32_0 = arith.constant 0 : i32
    return %arg0, %c0_i32 : i32, i32
  }
}

</mosaic_0001>

<llo_original>
// kernel: _mlp_pallas_impl.1
$region0: #{_mlp_pallas_impl.1}
  #allocation0 [shape = 'u32[]', space=smem, size = 0x4, offset = 0x4, fixed_abs, tag = 'smem constant byte address 0x4 - core index']
  #allocation1 [shape = 'u32[72,128]{1,0:T(1,128)}', space=vmem, size = 0x9000, scoped, tag = 'internal scratch']
  %s0 = inlined_call_operand.vmem [shape: f32[16,128], index: 0, kind: input, shape index: {}]
  %s1 = inlined_call_operand.hbm [shape: f32[128,128], index: 1, kind: input, shape index: {}]
  %s2 = inlined_call_operand.vmem [shape: f32[1,128], index: 2, kind: input, shape index: {}]
  %s3 = inlined_call_operand.hbm [shape: f32[128,128], index: 3, kind: input, shape index: {}]
  %s4 = inlined_call_operand.vmem [shape: f32[1,128], index: 4, kind: input, shape index: {}]
  %s5 = inlined_call_operand.vmem [shape: f32[16,128], index: 5, kind: output, shape index: {}]
  %s6 = sld [smem:[#allocation0]]
  $region61: #{_mlp_pallas_impl.1} parent=0
    _
  %s8 = ssub.s32 1, %s6
  %s9 = scalar_select 0, %s8, %s6
  $region1: #{_mlp_pallas_impl.1} parent=0
    #allocation2 [shape = 'u8[65536]{0}', space=vmem, size = 0x10000, scoped, tag = 'input window, operand 1, single buffered']
    #allocation3 [shape = 's32[2]{0}', space=sflag, size = 0x8, scoped, tag = 'scoped memory for _mlp_pallas_impl.1']
    #allocation4 [shape = 'u8[65536]{0}', space=vmem, size = 0x10000, scoped, tag = 'input window, operand 3, single buffered']
    #allocation5 [shape = 's32[1]{0}', space=sflag, size = 0x4, scoped, tag = 'scoped memory for _mlp_pallas_impl.1']
    %10 = vsyncpa [#allocation3], 0
    %11 = vsyncpa [#allocation5], 0
    loop: start=0, step=1, limit=4
    $region2: #{_mlp_pallas_impl.1} parent=1 // loop_pre_header
      _
    $region3: #{_mlp_pallas_impl.1} parent=1 // loop_header
      %s13 = sphi 0, %s17
      %p14 = scmp.ge.s32.totalorder %s13, 4
      %s23 = sphi 0, %s25
      %s26 = sphi 0, %s23
      %s27 = sphi 0, %s26
      %s43 = sphi 0, %s27
      %s47 = sphi 0, %s47
      %s49 = sphi 0, %s47
      %s50 = sphi 0, %s49
      %s64 = sphi 0, %s50
      %s68 = sphi 0, %s68
      %s70 = sphi 0, %s68
      %s71 = sphi 0, %s70
      %s85 = sphi 0, %s71
      %s89 = sphi 0, %s89
      %s91 = sphi 0, %s89
      %s92 = sphi 0, %s91
      %s106 = sphi 0, %s92
      %s110 = sphi 0, %s110
      %s112 = sphi 0, %s110
      %s113 = sphi 0, %s112
      %s127 = sphi 0, %s113
      %s133 = sphi 0, %s135
      %s136 = sphi 0, %s133
      %s137 = sphi 0, %s136
      %s153 = sphi 0, %s137
    $region4: #{_mlp_pallas_impl.1} parent=1 // loop_header_branch
      %16 = sbr.rel (%p14) target = $region8
    $region5: #{_mlp_pallas_impl.1} parent=1 // loop_body
      %s18 = ssub.s32 %s13, 1
      %s19 = ssub.s32 %s13, 2
      %s20 = sadd.s32 %s13, 1
      %s21 = ssub.s32 %s13, %s20
      %p22 = scmp.eq.s32.totalorder %s21, 0
      %s24 = sadd.s32 %s23, 1
      %s25 = scalar_select %p22, %s23, %s24
      %p28 = pneg %p22
      %p29 = scmp.eq.s32.totalorder %s13, 1
      %p30 = por %p28, %p29
      %p31 = scmp.ne.s32.totalorder %s23, %s26
      %p32 = scmp.eq.s32.totalorder %s13, 0
      %p33 = por %p31, %p32
      %p34 = scmp.ne.s32.totalorder %s23, %s26
      %p35 = scmp.eq.s32.totalorder %s18, 1
      %p36 = por %p34, %p35
      %p37 = scmp.ne.s32.totalorder %s26, %s27
      %p38 = scmp.eq.s32.totalorder %s18, 0
      %p39 = por %p37, %p38
      %p40 = scmp.ne.s32.totalorder %s26, %s27
      %p41 = scmp.eq.s32.totalorder %s19, 1
      %p42 = por %p40, %p41
      %p44 = scmp.ne.s32.totalorder %s27, %s43
      %p45 = scmp.eq.s32.totalorder %s19, 0
      %p46 = por %p44, %p45
      %s48 = sadd.s32 %s47, 1
      %p51 = scmp.eq.s32.totalorder %s13, 1
      %p52 = scmp.ne.s32.totalorder %s47, %s49
      %p53 = scmp.eq.s32.totalorder %s13, 0
      %p54 = por %p52, %p53
      %p55 = scmp.ne.s32.totalorder %s47, %s49
      %p56 = scmp.eq.s32.totalorder %s18, 1
      %p57 = por %p55, %p56
      %p58 = scmp.ne.s32.totalorder %s49, %s50
      %p59 = scmp.eq.s32.totalorder %s18, 0
      %p60 = por %p58, %p59
      %p61 = scmp.ne.s32.totalorder %s49, %s50
      %p62 = scmp.eq.s32.totalorder %s19, 1
      %p63 = por %p61, %p62
      %p65 = scmp.ne.s32.totalorder %s50, %s64
      %p66 = scmp.eq.s32.totalorder %s19, 0
      %p67 = por %p65, %p66
      %s69 = sadd.s32 %s68, 1
      %p72 = scmp.eq.s32.totalorder %s13, 1
      %p73 = scmp.ne.s32.totalorder %s68, %s70
      %p74 = scmp.eq.s32.totalorder %s13, 0
      %p75 = por %p73, %p74
      %p76 = scmp.ne.s32.totalorder %s68, %s70
      %p77 = scmp.eq.s32.totalorder %s18, 1
      %p78 = por %p76, %p77
      %p79 = scmp.ne.s32.totalorder %s70, %s71
      %p80 = scmp.eq.s32.totalorder %s18, 0
      %p81 = por %p79, %p80
      %p82 = scmp.ne.s32.totalorder %s70, %s71
      %p83 = scmp.eq.s32.totalorder %s19, 1
      %p84 = por %p82, %p83
      %p86 = scmp.ne.s32.totalorder %s71, %s85
      %p87 = scmp.eq.s32.totalorder %s19, 0
      %p88 = por %p86, %p87
      %s90 = sadd.s32 %s89, 1
      %p93 = scmp.eq.s32.totalorder %s13, 1
      %p94 = scmp.ne.s32.totalorder %s89, %s91
      %p95 = scmp.eq.s32.totalorder %s13, 0
      %p96 = por %p94, %p95
      %p97 = scmp.ne.s32.totalorder %s89, %s91
      %p98 = scmp.eq.s32.totalorder %s18, 1
      %p99 = por %p97, %p98
      %p100 = scmp.ne.s32.totalorder %s91, %s92
      %p101 = scmp.eq.s32.totalorder %s18, 0
      %p102 = por %p100, %p101
      %p103 = scmp.ne.s32.totalorder %s91, %s92
      %p104 = scmp.eq.s32.totalorder %s19, 1
      %p105 = por %p103, %p104
      %p107 = scmp.ne.s32.totalorder %s92, %s106
      %p108 = scmp.eq.s32.totalorder %s19, 0
      %p109 = por %p107, %p108
      %s111 = sadd.s32 %s110, 1
      %p114 = scmp.eq.s32.totalorder %s13, 1
      %p115 = scmp.ne.s32.totalorder %s110, %s112
      %p116 = scmp.eq.s32.totalorder %s13, 0
      %p117 = por %p115, %p116
      %p118 = scmp.ne.s32.totalorder %s110, %s112
      %p119 = scmp.eq.s32.totalorder %s18, 1
      %p120 = por %p118, %p119
      %p121 = scmp.ne.s32.totalorder %s112, %s113
      %p122 = scmp.eq.s32.totalorder %s18, 0
      %p123 = por %p121, %p122
      %p124 = scmp.ne.s32.totalorder %s112, %s113
      %p125 = scmp.eq.s32.totalorder %s19, 1
      %p126 = por %p124, %p125
      %p128 = scmp.ne.s32.totalorder %s113, %s127
      %p129 = scmp.eq.s32.totalorder %s19, 0
      %p130 = por %p128, %p129
      %s131 = ssub.s32 %s13, %s20
      %p132 = scmp.eq.s32.totalorder %s131, 0
      %s134 = sadd.s32 %s133, 1
      %s135 = scalar_select %p132, %s133, %s134
      %p138 = pneg %p132
      %p139 = scmp.eq.s32.totalorder %s13, 1
      %p140 = por %p138, %p139
      %p141 = scmp.ne.s32.totalorder %s133, %s136
      %p142 = scmp.eq.s32.totalorder %s13, 0
      %p143 = por %p141, %p142
      %p144 = scmp.ne.s32.totalorder %s133, %s136
      %p145 = scmp.eq.s32.totalorder %s18, 1
      %p146 = por %p144, %p145
      %p147 = scmp.ne.s32.totalorder %s136, %s137
      %p148 = scmp.eq.s32.totalorder %s18, 0
      %p149 = por %p147, %p148
      %p150 = scmp.ne.s32.totalorder %s136, %s137
      %p151 = scmp.eq.s32.totalorder %s19, 1
      %p152 = por %p150, %p151
      %p154 = scmp.ne.s32.totalorder %s137, %s153
      %p155 = scmp.eq.s32.totalorder %s19, 0
      %p156 = por %p154, %p155
      %p157 = scmp.le.s32.totalorder 1, %s13
      %p158 = scmp.lt.s32.totalorder %s13, 3
      %p159 = pnand %p157, %p158
      %p160 = pneg %p159
      // Predicated region
      $region9: #{_mlp_pallas_impl.1} parent=5 // pred_check
        _
      $region10: #{_mlp_pallas_impl.1} parent=5 // pred_check_branch
        %162 = sbr.rel (%p159) target = $region12
      $region11: #{_mlp_pallas_impl.1} parent=5 // pred_region
        %s163 = ssub.s32 %s13, 1
        // Predicated region
        $region13: #{_mlp_pallas_impl.1} parent=11 // pred_check
          %p164 = pneg %p60
        $region14: #{_mlp_pallas_impl.1} parent=11 // pred_check_branch
          %166 = sbr.rel (%p164) target = $region16
        $region15: #{_mlp_pallas_impl.1} parent=11 // pred_region
          %168 = vsyncadd [#allocation3], 0
          %s169 = sshll.u32 %s1, 4
          %s170 = int_to_ptr.hbm [resolvable:$true] %s169
          %s171 = sshll.u32 [#allocation2], 4
          %s172 = int_to_ptr.vmem [resolvable:$true] %s171
          %177 = dma.hbm_to_vmem [thread:$0]  %s170, 2048, %s172, [#allocation3], 128, 128, 8
        $region16: #{_mlp_pallas_impl.1} parent=11 // pred_fallthru
          _
        // Predicated region
        $region17: #{_mlp_pallas_impl.1} parent=11 // pred_check
          %p178 = pneg %p81
        $region18: #{_mlp_pallas_impl.1} parent=11 // pred_check_branch
          %180 = sbr.rel (%p178) target = $region20
        $region19: #{_mlp_pallas_impl.1} parent=11 // pred_region
          _
        $region20: #{_mlp_pallas_impl.1} parent=11 // pred_fallthru
          _
        // Predicated region
        $region21: #{_mlp_pallas_impl.1} parent=11 // pred_check
          %p181 = pneg %p102
        $region22: #{_mlp_pallas_impl.1} parent=11 // pred_check_branch
          %183 = sbr.rel (%p181) target = $region24
        $region23: #{_mlp_pallas_impl.1} parent=11 // pred_region
          %185 = vsyncadd [#allocation5], 0
          %s186 = sshll.u32 %s3, 4
          %s187 = int_to_ptr.hbm [resolvable:$true] %s186
          %s188 = sshll.u32 [#allocation4], 4
          %s189 = int_to_ptr.vmem [resolvable:$true] %s188
          %194 = dma.hbm_to_vmem [thread:$0]  %s187, 2048, %s189, [#allocation5], 128, 128, 8
        $region24: #{_mlp_pallas_impl.1} parent=11 // pred_fallthru
          _
        // Predicated region
        $region25: #{_mlp_pallas_impl.1} parent=11 // pred_check
          %p195 = pneg %p123
        $region26: #{_mlp_pallas_impl.1} parent=11 // pred_check_branch
          %197 = sbr.rel (%p195) target = $region28
        $region27: #{_mlp_pallas_impl.1} parent=11 // pred_region
          _
        $region28: #{_mlp_pallas_impl.1} parent=11 // pred_fallthru
          _
      $region12: #{_mlp_pallas_impl.1} parent=5 // pred_fallthru
        _
      %p198 = scmp.lt.s32.totalorder %s13, 2
      // Predicated region
      $region29: #{_mlp_pallas_impl.1} parent=5 // pred_check
        %p199 = pneg %p198
      $region30: #{_mlp_pallas_impl.1} parent=5 // pred_check_branch
        %201 = sbr.rel (%p199) target = $region32
      $region31: #{_mlp_pallas_impl.1} parent=5 // pred_region
        // Predicated region
        $region33: #{_mlp_pallas_impl.1} parent=31 // pred_check
          %p202 = pneg %p33
        $region34: #{_mlp_pallas_impl.1} parent=31 // pred_check_branch
          %204 = sbr.rel (%p202) target = $region36
        $region35: #{_mlp_pallas_impl.1} parent=31 // pred_region
          %p205 = scmp.lt.s32.totalorder %s13, 1
          %s206 = scalar_select %p205, %s13, 1
          %s207 = smul.addr %s206, 8
          %s208 = scalar_lea.vmem %s0, %s207
        $region36: #{_mlp_pallas_impl.1} parent=31 // pred_fallthru
          _
      $region32: #{_mlp_pallas_impl.1} parent=5 // pred_fallthru
        _
      %p209 = scmp.le.s32.totalorder 1, %s13
      %p210 = scmp.lt.s32.totalorder %s13, 3
      %p211 = pnand %p209, %p210
      %p212 = pneg %p211
      // Predicated region
      $region37: #{_mlp_pallas_impl.1} parent=5 // pred_check
        _
      $region38: #{_mlp_pallas_impl.1} parent=5 // pred_check_branch
        %214 = sbr.rel (%p211) target = $region40
      $region39: #{_mlp_pallas_impl.1} parent=5 // pred_region
        %s215 = ssub.s32 %s13, 1
        // Predicated region
        $region41: #{_mlp_pallas_impl.1} parent=39 // pred_check
          %p216 = pneg %p60
        $region42: #{_mlp_pallas_impl.1} parent=39 // pred_check_branch
          %218 = sbr.rel (%p216) target = $region44
        $region43: #{_mlp_pallas_impl.1} parent=39 // pred_region
          %220 = dma.done [#allocation3], 2048
        $region44: #{_mlp_pallas_impl.1} parent=39 // pred_fallthru
          _
        // Predicated region
        $region45: #{_mlp_pallas_impl.1} parent=39 // pred_check
          %p221 = pneg %p102
        $region46: #{_mlp_pallas_impl.1} parent=39 // pred_check_branch
          %223 = sbr.rel (%p221) target = $region48
        $region47: #{_mlp_pallas_impl.1} parent=39 // pred_region
          %225 = dma.done [#allocation5], 2048
        $region48: #{_mlp_pallas_impl.1} parent=39 // pred_fallthru
          _
        %p226 = scmp.lt.s32.totalorder %s18, 1
        %s227 = scalar_select %p226, %s18, 1
        %s228 = smul.addr %s227, 8
        %s229 = scalar_lea.vmem %s0, %s228
        %p230 = pneg %p39
        %p231 = pneg %p36
        %p232 = pneg %p60
        %p233 = pneg %p57
        %p234 = pneg %p81
        %p235 = pneg %p78
        %p236 = pneg %p102
        %p237 = pneg %p99
        %p238 = pneg %p123
        %p239 = pneg %p120
        %p240 = pneg %p149
        %p241 = pneg %p146
        %p242 = scmp.lt.s32.totalorder %s18, 1
        %s243 = scalar_select %p242, %s18, 1
        %s244 = smul.addr %s243, 8
        %s245 = scalar_lea.vmem %s5, %s244
        %p246 = scmp.lt.s32.totalorder %s18, 1
        %s247 = scalar_select %p246, %s18, 1
        %s248 = smul.addr %s247, 8
        %s249 = scalar_lea.vmem %s0, %s248
        %p250 = scmp.lt.s32.totalorder %s18, 1
        %s251 = scalar_select %p250, %s18, 1
        %s252 = smul.addr %s251, 8
        %s253 = scalar_lea.vmem %s5, %s252
        %v254 = vld [vmem:[%s249] sm:$0xff]
        %v255 = vld [vmem:[#allocation2] sm:$0xff]
        %v256 = vld [vmem:[#allocation2 + $0x8] sm:$0xff]
        %v257 = vld [vmem:[#allocation2 + $0x10] sm:$0xff]
        %v258 = vld [vmem:[#allocation2 + $0x18] sm:$0xff]
        %v259 = vld [vmem:[#allocation2 + $0x20] sm:$0xff]
        %v260 = vld [vmem:[#allocation2 + $0x28] sm:$0xff]
        %v261 = vld [vmem:[#allocation2 + $0x30] sm:$0xff]
        %v262 = vld [vmem:[#allocation2 + $0x38] sm:$0xff]
        %v263 = vld [vmem:[#allocation2 + $0x40] sm:$0xff]
        %v264 = vld [vmem:[#allocation2 + $0x48] sm:$0xff]
        %v265 = vld [vmem:[#allocation2 + $0x50] sm:$0xff]
        %v266 = vld [vmem:[#allocation2 + $0x58] sm:$0xff]
        %v267 = vld [vmem:[#allocation2 + $0x60] sm:$0xff]
        %v268 = vld [vmem:[#allocation2 + $0x68] sm:$0xff]
        %v269 = vld [vmem:[#allocation2 + $0x70] sm:$0xff]
        %v270 = vld [vmem:[#allocation2 + $0x78] sm:$0xff]
        %v271 = vld [vmem:[%s2] sm:$0x1]
        %v272 = vld [vmem:[#allocation4] sm:$0xff]
        %v273 = vld [vmem:[#allocation4 + $0x8] sm:$0xff]
        %v274 = vld [vmem:[#allocation4 + $0x10] sm:$0xff]
        %v275 = vld [vmem:[#allocation4 + $0x18] sm:$0xff]
        %v276 = vld [vmem:[#allocation4 + $0x20] sm:$0xff]
        %v277 = vld [vmem:[#allocation4 + $0x28] sm:$0xff]
        %v278 = vld [vmem:[#allocation4 + $0x30] sm:$0xff]
        %v279 = vld [vmem:[#allocation4 + $0x38] sm:$0xff]
        %v280 = vld [vmem:[#allocation4 + $0x40] sm:$0xff]
        %v281 = vld [vmem:[#allocation4 + $0x48] sm:$0xff]
        %v282 = vld [vmem:[#allocation4 + $0x50] sm:$0xff]
        %v283 = vld [vmem:[#allocation4 + $0x58] sm:$0xff]
        %v284 = vld [vmem:[#allocation4 + $0x60] sm:$0xff]
        %v285 = vld [vmem:[#allocation4 + $0x68] sm:$0xff]
        %v286 = vld [vmem:[#allocation4 + $0x70] sm:$0xff]
        %v287 = vld [vmem:[#allocation4 + $0x78] sm:$0xff]
        %v289 = vperm.slane %v271, 0
        %291 = vmatpush.msra.mxu0 %v270
        %292 = vmatpush.msra.mxu0 %v269
        %293 = vmatpush.msra.mxu0 %v268
        %294 = vmatpush.msra.mxu0 %v267
        %295 = vmatpush.msra.mxu0 %v266
        %296 = vmatpush.msra.mxu0 %v265
        %297 = vmatpush.msra.mxu0 %v264
        %298 = vmatpush.msra.mxu0 %v263
        %299 = vmatpush.msra.mxu0 %v262
        %300 = vmatpush.msra.mxu0 %v261
        %301 = vmatpush.msra.mxu0 %v260
        %302 = vmatpush.msra.mxu0 %v259
        %303 = vmatpush.msra.mxu0 %v258
        %304 = vmatpush.msra.mxu0 %v257
        %305 = vmatpush.msra.mxu0 %v256
        %306 = vmatpush.msra.mxu0 %v255
        %307 = vmatmul.f32.gmra.mxu0 %v254
        %v308 = vpop.f32.mrf.mxu0
        %v309 = vadd.f32 %v289, %v308
        %310 = vdwg.mxu0
        %v311 = vmul.f32 %v309, 0.5
        %v312 = vmul.f32 %v309, 0.70710677
        %v313 = vmul.f32 %v312, %v312
        %v314 = vmin.f32 16.0, %v313
        %v315 = vmul.f32 %v314, 2.1237322e-06
        %v316 = vadd.f32 %v315, 0.00028619796
        %v317 = vmul.f32 %v314, %v316
        %v318 = vadd.f32 %v317, 0.0036580483
        %v319 = vmul.f32 %v314, %v318
        %v320 = vadd.f32 %v319, 0.05243302
        %v321 = vmul.f32 %v314, %v320
        %v322 = vadd.f32 %v321, 0.18741608
        %v323 = vmul.f32 %v314, %v322
        %v324 = vadd.f32 %v323, 1.1283791
        %v325 = vmul.f32 %v312, %v324
        %v326 = vmul.f32 %v314, 3.8918573e-05
        %v327 = vadd.f32 %v326, 0.001143296
        %v328 = vmul.f32 %v314, %v327
        %v329 = vadd.f32 %v328, 0.014752088
        %v330 = vmul.f32 %v314, %v329
        %v331 = vadd.f32 %v330, 0.112945676
        %v332 = vmul.f32 %v314, %v331
        %v333 = vadd.f32 %v332, 0.4994258
        %v334 = vmul.f32 %v314, %v333
        %v335 = vadd.f32 %v334, 1.0
        %v336 = vrcp.pop %v335
        %v337 = vmul.f32 %v335, %v336
        %v338 = vsub.f32 1.0, %v337
        %v339 = vmul.f32 %v336, %v338
        %v340 = vadd.f32 %v336, %v339
        %vm341 = vweird.f32 %v335
        %vm342 = vweird.f32 %v336
        %vm343 = vmor %vm341, %vm342
        %v344 = vsel %vm343, %v336, %v340
        %v345 = vand.u32 2147483647, %v335
        %vm346 = vcmp.eq.f32.partialorder %v345, 8.507059e+37
        %v347 = vand.u32 %v335, 2147483648
        %v348 = vor.u32 1.1754944e-38, %v347
        %v349 = vsel %vm346, %v348, %v344
        %v350 = vmul.f32 %v325, %v349
        %v351 = vmin.f32 %v350, 1.0
        %v352 = vmax.f32 %v351, -1.0
        %v353 = vadd.f32 %v352, 1.0
        %v354 = vmul.f32 %v311, %v353
        %v355 = vld [vmem:[%s4] sm:$0x1]
        %v357 = vperm.slane %v355, 0
        %359 = vmatpush.msra.mxu0 %v287
        %360 = vmatpush.msra.mxu0 %v286
        %361 = vmatpush.msra.mxu0 %v285
        %362 = vmatpush.msra.mxu0 %v284
        %363 = vmatpush.msra.mxu0 %v283
        %364 = vmatpush.msra.mxu0 %v282
        %365 = vmatpush.msra.mxu0 %v281
        %366 = vmatpush.msra.mxu0 %v280
        %367 = vmatpush.msra.mxu0 %v279
        %368 = vmatpush.msra.mxu0 %v278
        %369 = vmatpush.msra.mxu0 %v277
        %370 = vmatpush.msra.mxu0 %v276
        %371 = vmatpush.msra.mxu0 %v275
        %372 = vmatpush.msra.mxu0 %v274
        %373 = vmatpush.msra.mxu0 %v273
        %374 = vmatpush.msra.mxu0 %v272
        %375 = vmatmul.f32.gmra.mxu0 %v354
        %v376 = vpop.f32.mrf.mxu0
        %v377 = vadd.f32 %v357, %v376
        %378 = vdwg.mxu0
        %379 = vst [vmem:[%s253] sm:$0xff] %v377
        %p380 = scmp.lt.s32.totalorder %s18, 1
        %s381 = scalar_select %p380, %s18, 1
        %s382 = smul.addr %s381, 8
        %s383 = scalar_lea.vmem %s5, %s382
        // Predicated region
        $region49: #{_mlp_pallas_impl.1} parent=39 // pred_check
          %p384 = pneg %p146
        $region50: #{_mlp_pallas_impl.1} parent=39 // pred_check_branch
          %386 = sbr.rel (%p384) target = $region52
        $region51: #{_mlp_pallas_impl.1} parent=39 // pred_region
          _
        $region52: #{_mlp_pallas_impl.1} parent=39 // pred_fallthru
          _
      $region40: #{_mlp_pallas_impl.1} parent=5 // pred_fallthru
        _
      %p387 = scmp.le.s32.totalorder 2, %s13
      // Predicated region
      $region53: #{_mlp_pallas_impl.1} parent=5 // pred_check
        %p388 = pneg %p387
      $region54: #{_mlp_pallas_impl.1} parent=5 // pred_check_branch
        %390 = sbr.rel (%p388) target = $region56
      $region55: #{_mlp_pallas_impl.1} parent=5 // pred_region
        %s391 = ssub.s32 %s13, 2
        // Predicated region
        $region57: #{_mlp_pallas_impl.1} parent=55 // pred_check
          %p392 = pneg %p152
        $region58: #{_mlp_pallas_impl.1} parent=55 // pred_check_branch
          %394 = sbr.rel (%p392) target = $region60
        $region59: #{_mlp_pallas_impl.1} parent=55 // pred_region
          %p395 = scmp.lt.s32.totalorder %s19, 1
          %s396 = scalar_select %p395, %s19, 1
          %s397 = smul.addr %s396, 8
          %s398 = scalar_lea.vmem %s5, %s397
        $region60: #{_mlp_pallas_impl.1} parent=55 // pred_fallthru
          _
      $region56: #{_mlp_pallas_impl.1} parent=5 // pred_fallthru
        _
    $region6: #{_mlp_pallas_impl.1} parent=1 // loop_footer
      %s17 = sadd.s32 1, %s13
    $region7: #{_mlp_pallas_impl.1} parent=1 // loop_footer_branch
      %12 = sbr.rel target = $region3
    $region8: #{_mlp_pallas_impl.1} parent=1 // loop_exit
      _
    %399 = vsyncpa [#allocation3], 1
    %s400 = scalar_lea.sflag [#allocation3], 1
    %401 = vsyncpa %s400, 1
    %402 = vsyncpa [#allocation5], 1

</llo_original>
